<compile_context>
chip_gen: v7x
topology: tpu7x:2x2x1
jax: 0.10.0
libtpu: 0.0.40
codegen_flags: <defaults>
</compile_context>

<pallas_src>
import functools
import math

import jax
import jax.numpy as jnp
from jax.experimental import pallas as pl
from jax.experimental.pallas import tpu as pltpu


# ------------------------------ GCN (plain XLA) -------------------------------
def gcn_embeddings(adj, w1, b1, w2, b2):
    """GCN node embeddings. The GCN input is eye(V), so I @ W1 == W1 and the
    (V, V) identity buffer / matmul are dropped entirely."""
    h = jax.nn.relu(jnp.dot(adj, w1) + b1)
    # TODO(synk): nn.Dropout(p=0.3) is identity at inference; training-mode dropout not modeled.
    return jnp.dot(adj, jnp.dot(h, w2)) + b2


# ------------------------ Drug-wise attention kernels --------------------------
def attention_kernel_vl(t_ref, x_ref, emb_ref, out_ref, attn_ref, *, approx_recip):
    """Attention weights produced directly in (V, L) layout (lane-dense over L)."""
    t = t_ref[...]                        # (L, D)  compute dtype (tanh precomputed in XLA)
    x = x_ref[...]                        # (L, D)  compute dtype
    emb = emb_ref[...]                    # (TV, D) compute dtype

    # scores (TV, L): contract over D, no transposes materialized.
    s = jax.lax.dot_general(
        emb, t, dimension_numbers=(((1,), (1,)), ((), ())),
        preferred_element_type=jnp.float32)

    # softmax over L (lane axis here) == softmax(dim=1) of the (B, L, V) scores.
    m = jnp.max(s, axis=1, keepdims=True)
    e = jnp.exp(s - m)
    denom = jnp.sum(e, axis=1, keepdims=True)
    a = e * pl.reciprocal(denom, approx=approx_recip)     # (TV, L), f32

    attn_ref[...] = a                                     # already in module layout

    # out (TV, D) = A @ x, contracted over L.
    out_ref[...] = jax.lax.dot_general(
        a.astype(x.dtype), x, dimension_numbers=(((1,), (0,)), ((), ())),
        preferred_element_type=jnp.float32)


def attention_kernel_lv(t_ref, x_ref, emb_ref, out_ref, attn_ref, *, approx_recip):
    """Fallback for small / non-128-aligned L: weights stored lane-dense over V."""
    t = t_ref[...]                        # (L, D)
    x = x_ref[...]                        # (L, D)
    emb = emb_ref[...]                    # (TV, D)

    s = jax.lax.dot_general(
        t, emb, dimension_numbers=(((1,), (1,)), ((), ())),
        preferred_element_type=jnp.float32)                # (L, TV)

    m = jnp.max(s, axis=0, keepdims=True)
    e = jnp.exp(s - m)
    denom = jnp.sum(e, axis=0, keepdims=True)
    a = e * pl.reciprocal(denom, approx=approx_recip)      # (L, TV)

    attn_ref[...] = a                                      # (L, TV); transposed in XLA

    out_ref[...] = jax.lax.dot_general(
        a.astype(x.dtype), x, dimension_numbers=(((0,), (0,)), ((), ())),
        preferred_element_type=jnp.float32)


# ------------------------------ tile planning ---------------------------------
def _tile_vmem_bytes(L, D, tv, cbytes):
    """Rough per-step VMEM residency: double-buffered I/O tiles + softmax temps."""
    in_bytes = 2 * (2 * L * D * cbytes + tv * D * cbytes)       # t, x, emb (x2 buffers)
    out_bytes = 2 * (tv * D * 4 + tv * L * 4)                   # out, attn (x2 buffers)
    work = 3 * tv * L * 4 + tv * D * 4                          # s/e/a + out before store
    return in_bytes + out_bytes + work


def _plan_block_v(B, L, D, V, cbytes, budget=40 * 1024 * 1024):
    """Largest V tile that fits the VMEM budget (full-V resident preferred);
    keep n_vt >= 2 when B == 1 so both v7x TensorCores get work."""
    cands = [V] + [t for t in (4096, 2048, 1024, 512, 256, 128) if t < V and V % t == 0]
    tv = cands[-1]
    for c in cands:
        if _tile_vmem_bytes(L, D, c, cbytes) <= budget:
            tv = c
            break
    if B == 1 and tv == V and len(cands) > 1:
        for c in cands[1:]:
            if _tile_vmem_bytes(L, D, c, cbytes) <= budget:
                tv = c
                break
    return tv


def _vmem_limit_bytes(est):
    # headroom over the estimate, capped so the same config is safe on v7x (64 MiB
    # physical VMEM) as well as v5e/v6e (128 MiB).
    return int(min(max(32 * 1024 * 1024, 2 * est), 56 * 1024 * 1024))


# ------------------------------- attention wrapper ----------------------------
def drugwise_attention(x, emb, *, compute_dtype=jnp.bfloat16, block_v=None):
    B, L, D = x.shape
    V = emb.shape[0]
    cbytes = jnp.dtype(compute_dtype).itemsize

    tv = block_v if block_v is not None else _plan_block_v(B, L, D, V, cbytes)
    assert V % tv == 0, (V, tv)
    n_vt = V // tv

    # Hoisted out of the kernel: tanh + casts run once in XLA, not once per V tile.
    t_c = jnp.tanh(x).astype(compute_dtype)
    x_c = x.astype(compute_dtype)
    emb_c = emb.astype(compute_dtype)

    approx_recip = compute_dtype != jnp.float32
    vl_layout = (L % 128 == 0)            # lane-dense unmasked stores in (B, V, L) layout

    kernel = functools.partial(
        attention_kernel_vl if vl_layout else attention_kernel_lv,
        approx_recip=approx_recip)

    if vl_layout:
        attn_shape = (B, V, L)
        attn_spec = pl.BlockSpec((pl.Squeezed(), tv, L), lambda v, b: (b, v, 0))
    else:
        attn_shape = (B, L, V)
        attn_spec = pl.BlockSpec((pl.Squeezed(), L, tv), lambda v, b: (b, 0, v))

    vmem_limit = _vmem_limit_bytes(_tile_vmem_bytes(L, D, tv, cbytes))

    out, attn_raw = pl.pallas_call(
        kernel,
        out_shape=(
            jax.ShapeDtypeStruct((B, V, D), jnp.float32),     # attention_output
            jax.ShapeDtypeStruct(attn_shape, jnp.float32),    # attention weights
        ),
        grid_spec=pltpu.PrefetchScalarGridSpec(
            num_scalar_prefetch=0,
            # V tiles outermost: the emb tile is held across the inner B loop so the
            # embedding table is streamed at most n_vt times total (once when n_vt == 1).
            grid=(n_vt, B),
            in_specs=[
                pl.BlockSpec((pl.Squeezed(), L, D), lambda v, b: (b, 0, 0)),   # tanh(x)
                pl.BlockSpec((pl.Squeezed(), L, D), lambda v, b: (b, 0, 0)),   # x
                pl.BlockSpec((tv, D), lambda v, b: (v, 0)),                    # emb tile
            ],
            out_specs=[
                pl.BlockSpec((pl.Squeezed(), tv, D), lambda v, b: (b, v, 0)),
                attn_spec,
            ],
        ),
        compiler_params=pltpu.CompilerParams(
            # Every (v, b) tile is independent (softmax is over L): both axes parallel
            # so both v7x TensorCores get work even when B == 1 (planner keeps n_vt >= 2).
            dimension_semantics=("parallel", "parallel"),
            vmem_limit_bytes=vmem_limit,
        ),
    )(t_c, x_c, emb_c)

    attn = attn_raw if vl_layout else jnp.transpose(attn_raw, (0, 2, 1))
    return out, attn


# ------------------------------- wiring ---------------------------------------
def drugwise_attention_layer(x, adj, params, *, compute_dtype=jnp.bfloat16):
    """Full forward: GCN embeddings (XLA prologue) -> drug-wise attention (Pallas).

    Returns (attention_output, attention_weight) like the PyTorch module."""
    emb = gcn_embeddings(adj, params["w1"], params["b1"], params["w2"], params["b2"])
    return drugwise_attention(x, emb, compute_dtype=compute_dtype)


# ------------------------------- reference / test ------------------------------
def _reference(x, adj, params):
    h = jnp.maximum(adj @ params["w1"] + params["b1"], 0.0)
    emb = adj @ (h @ params["w2"]) + params["b2"]
    t = jnp.tanh(x)
    s = jnp.einsum("bld,vd->blv", t, emb)
    a = jax.nn.softmax(s, axis=1)
    a = jnp.transpose(a, (0, 2, 1))
    o = jnp.einsum("bvl,bld->bvd", a, x)
    return o, a


def _make_params(keys, V, D):
    stdv = 1.0 / math.sqrt(D)
    return {
        "w1": jax.random.uniform(keys[0], (V, D), jnp.float32, -stdv, stdv),
        "b1": jax.random.uniform(keys[1], (D,), jnp.float32, -stdv, stdv),
        "w2": jax.random.uniform(keys[2], (D, D), jnp.float32, -stdv, stdv),
        "b2": jax.random.uniform(keys[3], (D,), jnp.float32, -stdv, stdv),
    }


if __name__ == "__main__":
    # ---- small shapes, strict f32 check (fallback (B, L, V) layout path) ------
    B, L, D, V = 2, 8, 32, 16
    key = jax.random.PRNGKey(0)
    k_x, k_adj, k_w1, k_b1, k_w2, k_b2 = jax.random.split(key, 6)

    x = jax.random.normal(k_x, (B, L, D), dtype=jnp.float32)
    adj = jax.random.uniform(k_adj, (V, V), dtype=jnp.float32)
    params = _make_params((k_w1, k_b1, k_w2, k_b2), V, D)

    fwd_f32 = jax.jit(functools.partial(drugwise_attention_layer, compute_dtype=jnp.float32))
    out, attn = jax.block_until_ready(fwd_f32(x, adj, params))
    ref_out, ref_attn = _reference(x, adj, params)

    assert out.shape == (B, V, D) and attn.shape == (B, V, L)
    assert jnp.allclose(out, ref_out, atol=1e-4, rtol=1e-4)
    assert jnp.allclose(attn, ref_attn, atol=1e-4, rtol=1e-4)

    # ---- larger shapes: bf16 MXU operands, resident emb, direct (B,V,L) layout -
    B2, L2, D2, V2 = 2, 128, 256, 512
    k2 = jax.random.split(jax.random.PRNGKey(1), 6)
    x2 = jax.random.normal(k2[0], (B2, L2, D2), dtype=jnp.float32)
    adj2 = jax.random.uniform(k2[1], (V2, V2), dtype=jnp.float32)
    adj2 = adj2 / jnp.sum(adj2, axis=1, keepdims=True)   # normalized co-occurrence
    params2 = _make_params(k2[2:], V2, D2)

    fwd_bf16 = jax.jit(drugwise_attention_layer)          # default compute_dtype = bf16
    out2, attn2 = jax.block_until_ready(fwd_bf16(x2, adj2, params2))
    ref_out2, ref_attn2 = _reference(x2, adj2, params2)

    assert out2.shape == (B2, V2, D2) and attn2.shape == (B2, V2, L2)
    assert jnp.allclose(out2, ref_out2, atol=3e-2, rtol=3e-2)
    assert jnp.allclose(attn2, ref_attn2, atol=3e-3, rtol=0.0)

    print("KERNEL_OK")
</pallas_src>

<mosaic_0001>
module attributes {stable_mosaic.version = 11 : i64} {
  func.func @attention_kernel_lv(%arg0: i32, %arg1: i32, %arg2: memref<1x8x32xf32, #tpu.memory_space<vmem>>, %arg3: memref<1x8x32xf32, #tpu.memory_space<vmem>>, %arg4: memref<16x32xf32, #tpu.memory_space<vmem>>, %arg5: memref<1x16x32xf32, #tpu.memory_space<vmem>>, %arg6: memref<1x8x16xf32, #tpu.memory_space<vmem>>) attributes {dimension_semantics = [#tpu.dimension_semantics<parallel>, #tpu.dimension_semantics<parallel>], iteration_bounds = array<i64: 1, 2>, scalar_prefetch = 0 : i64, scratch_operands = 0 : i64, tpu.core_type = #tpu.core_type<tc>, window_params = [{transform_indices = @transform_0, window_bounds = array<i64: 1, 8, 32>}, {transform_indices = @transform_1, window_bounds = array<i64: 1, 8, 32>}, {transform_indices = @transform_2, window_bounds = array<i64: 16, 32>}, {transform_indices = @transform_3, window_bounds = array<i64: 1, 16, 32>}, {transform_indices = @transform_4, window_bounds = array<i64: 1, 8, 16>}]} {
    %c0 = arith.constant 0 : index
    %c0_0 = arith.constant 0 : index
    %c0_1 = arith.constant 0 : index
    %0 = vector.load %arg2[%c0, %c0_0, %c0_1] : memref<1x8x32xf32, #tpu.memory_space<vmem>>, vector<1x8x32xf32>
    %1 = vector.shape_cast %0 : vector<1x8x32xf32> to vector<8x32xf32>
    %c0_2 = arith.constant 0 : index
    %c0_3 = arith.constant 0 : index
    %c0_4 = arith.constant 0 : index
    %2 = vector.load %arg3[%c0_2, %c0_3, %c0_4] : memref<1x8x32xf32, #tpu.memory_space<vmem>>, vector<1x8x32xf32>
    %3 = vector.shape_cast %2 : vector<1x8x32xf32> to vector<8x32xf32>
    %c0_5 = arith.constant 0 : index
    %c0_6 = arith.constant 0 : index
    %4 = vector.load %arg4[%c0_5, %c0_6] : memref<16x32xf32, #tpu.memory_space<vmem>>, vector<16x32xf32>
    %cst = arith.constant dense<0.000000e+00> : vector<8x16xf32>
    %5 = tpu.matmul %1, %4, %cst {dimension_numbers = #tpu.dot_dimension_numbers<[1], [1], [0], [0], [0, 0, 1, 0], [], []>} : vector<8x32xf32>, vector<16x32xf32>, vector<8x16xf32> -> vector<8x16xf32>
    %cst_7 = arith.constant dense<0xFF800000> : vector<16xf32>
    %6 = vector.multi_reduction <maximumf>, %5, %cst_7 [0] : vector<8x16xf32> to vector<16xf32>
    %7 = vector.shape_cast %6 : vector<16xf32> to vector<1x16xf32>
    %8 = vector.broadcast %7 : vector<1x16xf32> to vector<8x16xf32>
    %9 = arith.subf %5, %8 : vector<8x16xf32>
    %10 = math.exp %9 : vector<8x16xf32>
    %cst_8 = arith.constant dense<0.000000e+00> : vector<16xf32>
    %11 = vector.multi_reduction <add>, %10, %cst_8 [0] : vector<8x16xf32> to vector<16xf32>
    %12 = vector.shape_cast %11 : vector<16xf32> to vector<1x16xf32>
    %13 = tpu.reciprocal %12 : vector<1x16xf32> -> vector<1x16xf32>
    %14 = vector.broadcast %13 : vector<1x16xf32> to vector<8x16xf32>
    %15 = arith.mulf %10, %14 : vector<8x16xf32>
    %c0_9 = arith.constant 0 : index
    %c0_10 = arith.constant 0 : index
    %c0_11 = arith.constant 0 : index
    %16 = vector.load %arg6[%c0_9, %c0_10, %c0_11] : memref<1x8x16xf32, #tpu.memory_space<vmem>>, vector<1x8x16xf32>
    %17 = vector.shape_cast %16 : vector<1x8x16xf32> to vector<8x16xf32>
    %18 = vector.shape_cast %15 : vector<8x16xf32> to vector<1x8x16xf32>
    tpu.vector_store %arg6[%c0_9, %c0_10, %c0_11], %18 {strides = array<i32>} : memref<1x8x16xf32, #tpu.memory_space<vmem>>, vector<1x8x16xf32>,
    %cst_12 = arith.constant dense<0.000000e+00> : vector<16x32xf32>
    %19 = tpu.matmul %15, %3, %cst_12 {dimension_numbers = #tpu.dot_dimension_numbers<[0], [0], [1], [1], [0, 1, 1, 1], [], []>} : vector<8x16xf32>, vector<8x32xf32>, vector<16x32xf32> -> vector<16x32xf32>
    %c0_13 = arith.constant 0 : index
    %c0_14 = arith.constant 0 : index
    %c0_15 = arith.constant 0 : index
    %20 = vector.load %arg5[%c0_13, %c0_14, %c0_15] : memref<1x16x32xf32, #tpu.memory_space<vmem>>, vector<1x16x32xf32>
    %21 = vector.shape_cast %20 : vector<1x16x32xf32> to vector<16x32xf32>
    %22 = vector.shape_cast %19 : vector<16x32xf32> to vector<1x16x32xf32>
    tpu.vector_store %arg5[%c0_13, %c0_14, %c0_15], %22 {strides = array<i32>} : memref<1x16x32xf32, #tpu.memory_space<vmem>>, vector<1x16x32xf32>,
    return
  }
  func.func @transform_0(%arg0: i32, %arg1: i32) -> (i32, i32, i32) {
    %c0_i32 = arith.constant 0 : i32
    %c0_i32_0 = arith.constant 0 : i32
    %c0_i32_1 = arith.constant 0 : i32
    return %arg1, %c0_i32, %c0_i32_0 : i32, i32, i32
  }
  func.func @transform_1(%arg0: i32, %arg1: i32) -> (i32, i32, i32) {
    %c0_i32 = arith.constant 0 : i32
    %c0_i32_0 = arith.constant 0 : i32
    %c0_i32_1 = arith.constant 0 : i32
    return %arg1, %c0_i32, %c0_i32_0 : i32, i32, i32
  }
  func.func @transform_2(%arg0: i32, %arg1: i32) -> (i32, i32) {
    %c0_i32 = arith.constant 0 : i32
    %c0_i32_0 = arith.constant 0 : i32
    return %arg0, %c0_i32 : i32, i32
  }
  func.func @transform_3(%arg0: i32, %arg1: i32) -> (i32, i32, i32) {
    %c0_i32 = arith.constant 0 : i32
    %c0_i32_0 = arith.constant 0 : i32
    return %arg1, %arg0, %c0_i32 : i32, i32, i32
  }
  func.func @transform_4(%arg0: i32, %arg1: i32) -> (i32, i32, i32) {
    %c0_i32 = arith.constant 0 : i32
    %c0_i32_0 = arith.constant 0 : i32
    return %arg1, %c0_i32, %arg0 : i32, i32, i32
  }
}

</mosaic_0001>

<llo_original>
// kernel: drugwise_attention_layer.1
$region0: #{drugwise_attention_layer.1}
  #allocation0 [shape = 'u32[]', space=smem, size = 0x4, offset = 0x4, fixed_abs, tag = 'smem constant byte address 0x4 - core index']
  #allocation1 [shape = 'u32[144,128]{1,0:T(1,128)}', space=vmem, size = 0x12000, scoped, tag = 'internal scratch']
  %s0 = inlined_call_operand.vmem [shape: f32[2,8,32], index: 0, kind: input, shape index: {}]
  %s1 = inlined_call_operand.vmem [shape: f32[2,8,32], index: 1, kind: input, shape index: {}]
  %s2 = inlined_call_operand.vmem [shape: f32[16,32], index: 2, kind: input, shape index: {}]
  %s3 = inlined_call_operand.hbm [shape: f32[2,16,32], index: 3, kind: output, shape index: {0}]
  %s4 = inlined_call_operand.hbm [shape: f32[2,8,16], index: 4, kind: output, shape index: {1}]
  %5 = xla_tuple %s3, %s4
  %s6 = sld [smem:[#allocation0]]
  $region53: #{drugwise_attention_layer.1} parent=0
    _
  %s8 = ssub.s32 1, %s6
  %s9 = scalar_select 0, %s8, %s6
  $region1: #{drugwise_attention_layer.1} parent=0
    #allocation2 [shape = 'u8[16384]{0}', space=vmem, size = 0x4000, scoped, tag = 'output window, operand 0']
    #allocation3 [shape = 's32[2]{0}', space=sflag, size = 0x8, scoped, tag = 'scoped memory for drugwise_attention_layer.1']
    #allocation4 [shape = 'u8[8192]{0}', space=vmem, size = 0x2000, scoped, tag = 'output window, operand 1']
    #allocation5 [shape = 's32[2]{0}', space=sflag, size = 0x8, scoped, tag = 'scoped memory for drugwise_attention_layer.1']
    %10 = vsyncpa [#allocation3], 0
    %s11 = scalar_lea.sflag [#allocation3], 1
    %12 = vsyncpa %s11, 0
    %13 = vsyncpa [#allocation5], 0
    %s14 = scalar_lea.sflag [#allocation5], 1
    %15 = vsyncpa %s14, 0
    loop: start=0, step=1, limit=4
    $region2: #{drugwise_attention_layer.1} parent=1 // loop_pre_header
      _
    $region3: #{drugwise_attention_layer.1} parent=1 // loop_header
      %s17 = sphi 0, %s21
      %p18 = scmp.ge.s32.totalorder %s17, 4
      %s24 = sphi 0, %s36
      %s25 = sphi 0, %s32
      %s26 = sphi 0, %s24
      %s27 = sphi 0, %s25
      %s28 = sphi 0, %s26
      %s29 = sphi 0, %s27
      %s39 = sphi 0, %s41
      %s42 = sphi 0, %s39
      %s43 = sphi 0, %s42
      %s59 = sphi 0, %s43
      %s65 = sphi 0, %s67
      %s68 = sphi 0, %s65
      %s69 = sphi 0, %s68
      %s85 = sphi 0, %s69
      %s91 = sphi 0, %s93
      %s94 = sphi 0, %s91
      %s95 = sphi 0, %s94
      %s111 = sphi 0, %s95
      %s119 = sphi 0, %s121
      %s122 = sphi 0, %s119
      %s123 = sphi 0, %s122
      %s139 = sphi 0, %s123
      %s147 = sphi 0, %s149
      %s150 = sphi 0, %s147
      %s151 = sphi 0, %s150
      %s167 = sphi 0, %s151
    $region4: #{drugwise_attention_layer.1} parent=1 // loop_header_branch
      %20 = sbr.rel (%p18) target = $region8
    $region5: #{drugwise_attention_layer.1} parent=1 // loop_body
      %s22 = ssub.s32 %s17, 1
      %s23 = ssub.s32 %s17, 2
      %s30 = sadd.s32 1, %s25
      %p31 = scmp.ge.s32.totalorder %s30, 2
      %s32 = scalar_select %p31, 0, %s30
      %s33 = sadd.s32 1, %s24
      %s34 = scalar_select %p31, %s33, %s24
      %p35 = scmp.ge.s32.totalorder %s34, 1
      %s36 = scalar_select %p35, 0, %s34
      %s37 = ssub.s32 %s25, %s32
      %p38 = scmp.eq.s32.totalorder %s37, 0
      %s40 = sadd.s32 %s39, 1
      %s41 = scalar_select %p38, %s39, %s40
      %p44 = pneg %p38
      %p45 = scmp.eq.s32.totalorder %s17, 1
      %p46 = por %p44, %p45
      %p47 = scmp.ne.s32.totalorder %s39, %s42
      %p48 = scmp.eq.s32.totalorder %s17, 0
      %p49 = por %p47, %p48
      %p50 = scmp.ne.s32.totalorder %s39, %s42
      %p51 = scmp.eq.s32.totalorder %s22, 1
      %p52 = por %p50, %p51
      %p53 = scmp.ne.s32.totalorder %s42, %s43
      %p54 = scmp.eq.s32.totalorder %s22, 0
      %p55 = por %p53, %p54
      %p56 = scmp.ne.s32.totalorder %s42, %s43
      %p57 = scmp.eq.s32.totalorder %s23, 1
      %p58 = por %p56, %p57
      %p60 = scmp.ne.s32.totalorder %s43, %s59
      %p61 = scmp.eq.s32.totalorder %s23, 0
      %p62 = por %p60, %p61
      %s63 = ssub.s32 %s25, %s32
      %p64 = scmp.eq.s32.totalorder %s63, 0
      %s66 = sadd.s32 %s65, 1
      %s67 = scalar_select %p64, %s65, %s66
      %p70 = pneg %p64
      %p71 = scmp.eq.s32.totalorder %s17, 1
      %p72 = por %p70, %p71
      %p73 = scmp.ne.s32.totalorder %s65, %s68
      %p74 = scmp.eq.s32.totalorder %s17, 0
      %p75 = por %p73, %p74
      %p76 = scmp.ne.s32.totalorder %s65, %s68
      %p77 = scmp.eq.s32.totalorder %s22, 1
      %p78 = por %p76, %p77
      %p79 = scmp.ne.s32.totalorder %s68, %s69
      %p80 = scmp.eq.s32.totalorder %s22, 0
      %p81 = por %p79, %p80
      %p82 = scmp.ne.s32.totalorder %s68, %s69
      %p83 = scmp.eq.s32.totalorder %s23, 1
      %p84 = por %p82, %p83
      %p86 = scmp.ne.s32.totalorder %s69, %s85
      %p87 = scmp.eq.s32.totalorder %s23, 0
      %p88 = por %p86, %p87
      %s89 = ssub.s32 %s24, %s36
      %p90 = scmp.eq.s32.totalorder %s89, 0
      %s92 = sadd.s32 %s91, 1
      %s93 = scalar_select %p90, %s91, %s92
      %p96 = pneg %p90
      %p97 = scmp.eq.s32.totalorder %s17, 1
      %p98 = por %p96, %p97
      %p99 = scmp.ne.s32.totalorder %s91, %s94
      %p100 = scmp.eq.s32.totalorder %s17, 0
      %p101 = por %p99, %p100
      %p102 = scmp.ne.s32.totalorder %s91, %s94
      %p103 = scmp.eq.s32.totalorder %s22, 1
      %p104 = por %p102, %p103
      %p105 = scmp.ne.s32.totalorder %s94, %s95
      %p106 = scmp.eq.s32.totalorder %s22, 0
      %p107 = por %p105, %p106
      %p108 = scmp.ne.s32.totalorder %s94, %s95
      %p109 = scmp.eq.s32.totalorder %s23, 1
      %p110 = por %p108, %p109
      %p112 = scmp.ne.s32.totalorder %s95, %s111
      %p113 = scmp.eq.s32.totalorder %s23, 0
      %p114 = por %p112, %p113
      %s115 = ssub.s32 %s25, %s32
      %s116 = ssub.s32 %s24, %s36
      %s117 = sor.u32 %s115, %s116
      %p118 = scmp.eq.s32.totalorder %s117, 0
      %s120 = sadd.s32 %s119, 1
      %s121 = scalar_select %p118, %s119, %s120
      %p124 = pneg %p118
      %p125 = scmp.eq.s32.totalorder %s17, 1
      %p126 = por %p124, %p125
      %p127 = scmp.ne.s32.totalorder %s119, %s122
      %p128 = scmp.eq.s32.totalorder %s17, 0
      %p129 = por %p127, %p128
      %p130 = scmp.ne.s32.totalorder %s119, %s122
      %p131 = scmp.eq.s32.totalorder %s22, 1
      %p132 = por %p130, %p131
      %p133 = scmp.ne.s32.totalorder %s122, %s123
      %p134 = scmp.eq.s32.totalorder %s22, 0
      %p135 = por %p133, %p134
      %p136 = scmp.ne.s32.totalorder %s122, %s123
      %p137 = scmp.eq.s32.totalorder %s23, 1
      %p138 = por %p136, %p137
      %p140 = scmp.ne.s32.totalorder %s123, %s139
      %p141 = scmp.eq.s32.totalorder %s23, 0
      %p142 = por %p140, %p141
      %s143 = ssub.s32 %s25, %s32
      %s144 = ssub.s32 %s24, %s36
      %s145 = sor.u32 %s143, %s144
      %p146 = scmp.eq.s32.totalorder %s145, 0
      %s148 = sadd.s32 %s147, 1
      %s149 = scalar_select %p146, %s147, %s148
      %p152 = pneg %p146
      %p153 = scmp.eq.s32.totalorder %s17, 1
      %p154 = por %p152, %p153
      %p155 = scmp.ne.s32.totalorder %s147, %s150
      %p156 = scmp.eq.s32.totalorder %s17, 0
      %p157 = por %p155, %p156
      %p158 = scmp.ne.s32.totalorder %s147, %s150
      %p159 = scmp.eq.s32.totalorder %s22, 1
      %p160 = por %p158, %p159
      %p161 = scmp.ne.s32.totalorder %s150, %s151
      %p162 = scmp.eq.s32.totalorder %s22, 0
      %p163 = por %p161, %p162
      %p164 = scmp.ne.s32.totalorder %s150, %s151
      %p165 = scmp.eq.s32.totalorder %s23, 1
      %p166 = por %p164, %p165
      %p168 = scmp.ne.s32.totalorder %s151, %s167
      %p169 = scmp.eq.s32.totalorder %s23, 0
      %p170 = por %p168, %p169
      %p171 = scmp.le.s32.totalorder 1, %s17
      %p172 = scmp.lt.s32.totalorder %s17, 3
      %p173 = pnand %p171, %p172
      %p174 = pneg %p173
      // Predicated region
      $region9: #{drugwise_attention_layer.1} parent=5 // pred_check
        _
      $region10: #{drugwise_attention_layer.1} parent=5 // pred_check_branch
        %176 = sbr.rel (%p173) target = $region12
      $region11: #{drugwise_attention_layer.1} parent=5 // pred_region
        %s177 = ssub.s32 %s17, 1
        // Predicated region
        $region13: #{drugwise_attention_layer.1} parent=11 // pred_check
          %p178 = pneg %p107
        $region14: #{drugwise_attention_layer.1} parent=11 // pred_check_branch
          %180 = sbr.rel (%p178) target = $region16
        $region15: #{drugwise_attention_layer.1} parent=11 // pred_region
          %s181 = smul.u32 2, %s26
          %p182 = scmp.lt.s32.totalorder %s181, 1
          %s183 = scalar_select %p182, %s181, 1
          %s184 = smul.addr %s183, 8
          %s185 = scalar_lea.vmem %s2, %s184
          %s186 = smul.u32 2, %s26
        $region16: #{drugwise_attention_layer.1} parent=11 // pred_fallthru
          _
      $region12: #{drugwise_attention_layer.1} parent=5 // pred_fallthru
        _
      %p187 = scmp.lt.s32.totalorder %s17, 2
      // Predicated region
      $region17: #{drugwise_attention_layer.1} parent=5 // pred_check
        %p188 = pneg %p187
      $region18: #{drugwise_attention_layer.1} parent=5 // pred_check_branch
        %190 = sbr.rel (%p188) target = $region20
      $region19: #{drugwise_attention_layer.1} parent=5 // pred_region
        // Predicated region
        $region21: #{drugwise_attention_layer.1} parent=19 // pred_check
          %p191 = pneg %p49
        $region22: #{drugwise_attention_layer.1} parent=19 // pred_check_branch
          %193 = sbr.rel (%p191) target = $region24
        $region23: #{drugwise_attention_layer.1} parent=19 // pred_region
          %p194 = scmp.lt.s32.totalorder %s25, 1
          %s195 = scalar_select %p194, %s25, 1
          %s196 = smul.addr %s195, 8
          %s197 = scalar_lea.vmem %s0, %s196
        $region24: #{drugwise_attention_layer.1} parent=19 // pred_fallthru
          _
        // Predicated region
        $region25: #{drugwise_attention_layer.1} parent=19 // pred_check
          %p198 = pneg %p75
        $region26: #{drugwise_attention_layer.1} parent=19 // pred_check_branch
          %200 = sbr.rel (%p198) target = $region28
        $region27: #{drugwise_attention_layer.1} parent=19 // pred_region
          %p201 = scmp.lt.s32.totalorder %s25, 1
          %s202 = scalar_select %p201, %s25, 1
          %s203 = smul.addr %s202, 8
          %s204 = scalar_lea.vmem %s1, %s203
        $region28: #{drugwise_attention_layer.1} parent=19 // pred_fallthru
          _
      $region20: #{drugwise_attention_layer.1} parent=5 // pred_fallthru
        _
      %p205 = scmp.le.s32.totalorder 1, %s17
      %p206 = scmp.lt.s32.totalorder %s17, 3
      %p207 = pnand %p205, %p206
      %p208 = pneg %p207
      // Predicated region
      $region29: #{drugwise_attention_layer.1} parent=5 // pred_check
        _
      $region30: #{drugwise_attention_layer.1} parent=5 // pred_check_branch
        %210 = sbr.rel (%p207) target = $region32
      $region31: #{drugwise_attention_layer.1} parent=5 // pred_region
        %s211 = ssub.s32 %s17, 1
        %p212 = scmp.lt.s32.totalorder %s27, 1
        %s213 = scalar_select %p212, %s27, 1
        %s214 = smul.addr %s213, 8
        %s215 = scalar_lea.vmem %s0, %s214
        %p216 = pneg %p55
        %p217 = pneg %p52
        %p218 = scmp.lt.s32.totalorder %s27, 1
        %s219 = scalar_select %p218, %s27, 1
        %s220 = smul.addr %s219, 8
        %s221 = scalar_lea.vmem %s1, %s220
        %p222 = pneg %p81
        %p223 = pneg %p78
        %s224 = smul.u32 2, %s26
        %p225 = scmp.lt.s32.totalorder %s224, 1
        %s226 = scalar_select %p225, %s224, 1
        %s227 = smul.addr %s226, 8
        %s228 = scalar_lea.vmem %s2, %s227
        %p229 = pneg %p107
        %p230 = pneg %p104
        %p231 = pneg %p135
        %p232 = pneg %p132
        %s233 = sand.u32 %s122, 1
        %s234 = scalar_lea.sflag [#allocation3], %s233
        %s235 = sand.u32 %s122, 1
        %s236 = smul.addr %s235, 16
        %s237 = scalar_lea.vmem [#allocation2], %s236
        %p238 = pneg %p163
        %p239 = pneg %p160
        %s240 = sand.u32 %s150, 1
        %s241 = scalar_lea.sflag [#allocation5], %s240
        %s242 = sand.u32 %s150, 1
        %s243 = smul.addr %s242, 8
        %s244 = scalar_lea.vmem [#allocation4], %s243
        %p245 = scmp.lt.s32.totalorder %s27, 1
        %s246 = scalar_select %p245, %s27, 1
        %s247 = smul.addr %s246, 8
        %s248 = scalar_lea.vmem %s0, %s247
        %p249 = scmp.lt.s32.totalorder %s27, 1
        %s250 = scalar_select %p249, %s27, 1
        %s251 = smul.addr %s250, 8
        %s252 = scalar_lea.vmem %s1, %s251
        %s253 = smul.u32 2, %s26
        %p254 = scmp.lt.s32.totalorder %s253, 1
        %s255 = scalar_select %p254, %s253, 1
        %s256 = smul.addr %s255, 8
        %s257 = scalar_lea.vmem %s2, %s256
        %s258 = smul.u32 2, %s26
        %s259 = smul.u32 2, %s26
        %v260 = vld [vmem:[%s248] sm:$0xff]
        %v261 = vld [vmem:[%s252] sm:$0xff]
        %v262 = vld [vmem:[%s257] sm:$0xff]
        %v263 = vld [vmem:[%s257 + $0x8] sm:$0xff]
        %vm264 = vcmask 261120
        %v266 = vsel %vm264, %v260, 0
        %v269 = vsel %vm264, %v262, 0
        %v272 = vsel %vm264, %v263, 0
        %274 = vmatprep.subr.mxu0 0.0
        %275 = vmatpush1.xpose.msra.mxu0 %v269
        %276 = vmatprep.subr.mxu0 0.0
        %277 = vmatpush1.xpose.msra.mxu0 %v272
        %278 = vmatprep.subr.mxu0 0.0
        %279 = vmatpush1.xpose.msra.mxu0 0.0
        %280 = vmatprep.subr.mxu0 0.0
        %281 = vmatpush1.xpose.msra.mxu0 0.0
        %282 = vmatprep.subr.mxu0 0.0
        %283 = vmatpush1.xpose.msra.mxu0 0.0
        %284 = vmatprep.subr.mxu0 0.0
        %285 = vmatpush1.xpose.msra.mxu0 0.0
        %286 = vmatprep.subr.mxu0 0.0
        %287 = vmatpush1.xpose.msra.mxu0 0.0
        %288 = vmatprep.subr.mxu0 0.0
        %289 = vmatpush1.xpose.msra.mxu0 0.0
        %290 = vmatprep.subr.mxu0 0.0
        %291 = vmatpush1.xpose.msra.mxu0 0.0
        %292 = vmatprep.subr.mxu0 0.0
        %293 = vmatpush1.xpose.msra.mxu0 0.0
        %294 = vmatprep.subr.mxu0 0.0
        %295 = vmatpush1.xpose.msra.mxu0 0.0
        %296 = vmatprep.subr.mxu0 0.0
        %297 = vmatpush1.xpose.msra.mxu0 0.0
        %298 = vmatprep.subr.mxu0 0.0
        %299 = vmatpush1.xpose.msra.mxu0 0.0
        %300 = vmatprep.subr.mxu0 0.0
        %301 = vmatpush1.xpose.msra.mxu0 0.0
        %302 = vmatprep.subr.mxu0 0.0
        %303 = vmatpush1.xpose.msra.mxu0 0.0
        %304 = vmatprep.subr.mxu0 0.0
        %305 = vmatpush1.xpose.msra.mxu0 0.0
        %306 = vmatprep.subr.mxu0 0.0
        %307 = vmatpush1.xpose.msra.mxu0 0.0
        %308 = vmatprep.subr.mxu0 0.0
        %309 = vmatpush1.xpose.msra.mxu0 0.0
        %310 = vmatprep.subr.mxu0 0.0
        %311 = vmatpush1.xpose.msra.mxu0 0.0
        %312 = vmatprep.subr.mxu0 0.0
        %313 = vmatpush1.xpose.msra.mxu0 0.0
        %314 = vmatprep.subr.mxu0 0.0
        %315 = vmatpush1.xpose.msra.mxu0 0.0
        %316 = vmatprep.subr.mxu0 0.0
        %317 = vmatpush1.xpose.msra.mxu0 0.0
        %318 = vmatprep.subr.mxu0 0.0
        %319 = vmatpush1.xpose.msra.mxu0 0.0
        %320 = vmatprep.subr.mxu0 0.0
        %321 = vmatpush1.xpose.msra.mxu0 0.0
        %322 = vmatprep.subr.mxu0 0.0
        %323 = vmatpush1.xpose.msra.mxu0 0.0
        %324 = vmatprep.subr.mxu0 0.0
        %325 = vmatpush1.xpose.msra.mxu0 0.0
        %326 = vmatprep.subr.mxu0 0.0
        %327 = vmatpush1.xpose.msra.mxu0 0.0
        %328 = vmatprep.subr.mxu0 0.0
        %329 = vmatpush1.xpose.msra.mxu0 0.0
        %330 = vmatprep.subr.mxu0 0.0
        %331 = vmatpush1.xpose.msra.mxu0 0.0
        %332 = vmatprep.subr.mxu0 0.0
        %333 = vmatpush1.xpose.msra.mxu0 0.0
        %334 = vmatprep.subr.mxu0 0.0
        %335 = vmatpush1.xpose.msra.mxu0 0.0
        %336 = vmatprep.subr.mxu0 0.0
        %337 = vmatpush1.xpose.msra.mxu0 0.0
        %338 = vmatprep.mubr.f32.mxu0 0.0
        %339 = vmatmul.mubr.f32.gmra.mrb[0].mxu0 %v266
        %v340 = vpop.f32.mrb[0].mxu0
        %v341 = vadd.f32 0.0, %v340
        %v342 = vpop.f32.mrb[0].mxu0
        %343 = vdwg.mxu0
        %vm344 = vcmask 130048
        %v345 = vsel %vm344, %v341, -inf
        %v346 = vrot.slane %v345, 4
        %v347 = vmax.f32 %v345, %v346
        %v348 = vrot.slane %v347, 2
        %v349 = vmax.f32 %v347, %v348
        %v350 = vrot.slane %v349, 1
        %v351 = vmax.f32 %v349, %v350
        %v352 = vsub.f32 %v341, %v351
        %v353 = vmul.f32 %v352, 1.442695
        %v354 = vpow.pop %v353
        %v355 = vsel %vm344, %v354, 0.0
        %v356 = vrot.slane %v355, 4
        %v357 = vadd.f32 %v355, %v356
        %v358 = vrot.slane %v357, 2
        %v359 = vadd.f32 %v357, %v358
        %v360 = vrot.slane %v359, 1
        %v361 = vadd.f32 %v359, %v360
        %v362 = vrcp.pop %v361
        %v363 = vmul.f32 %v354, %v362
        %364 = vst.msk [vmem:[%s244] sm:$0xff] %vm344, %v363
        %365 = vxpose.xlu0.b32.start [1/16] %v363, 128
        %366 = vxpose.xlu0.b32.cont [2/16] 0.0, 128
        %367 = vxpose.xlu0.b32.cont [3/16] 0.0, 128
        %368 = vxpose.xlu0.b32.cont [4/16] 0.0, 128
        %369 = vxpose.xlu0.b32.cont [5/16] 0.0, 128
        %370 = vxpose.xlu0.b32.cont [6/16] 0.0, 128
        %371 = vxpose.xlu0.b32.cont [7/16] 0.0, 128
        %372 = vxpose.xlu0.b32.cont [8/16] 0.0, 128
        %373 = vxpose.xlu0.b32.cont [9/16] 0.0, 128
        %374 = vxpose.xlu0.b32.cont [10/16] 0.0, 128
        %375 = vxpose.xlu0.b32.cont [11/16] 0.0, 128
        %376 = vxpose.xlu0.b32.cont [12/16] 0.0, 128
        %377 = vxpose.xlu0.b32.cont [13/16] 0.0, 128
        %378 = vxpose.xlu0.b32.cont [14/16] 0.0, 128
        %379 = vxpose.xlu0.b32.cont [15/16] 0.0, 128
        %380 = vxpose.xlu0.b32.end [16/16] 0.0, 128
        %v381 = vpop.trf.xlu0
        %v382 = vpop.trf.xlu0
        %v383 = vpop.trf.xlu0
        %v384 = vpop.trf.xlu0
        %v385 = vpop.trf.xlu0
        %v386 = vpop.trf.xlu0
        %v387 = vpop.trf.xlu0
        %v388 = vpop.trf.xlu0
        %v389 = vpop.trf.xlu0
        %v390 = vpop.trf.xlu0
        %v391 = vpop.trf.xlu0
        %v392 = vpop.trf.xlu0
        %v393 = vpop.trf.xlu0
        %v394 = vpop.trf.xlu0
        %v395 = vpop.trf.xlu0
        %v396 = vpop.trf.xlu0
        %vm397 = vcmask 64512
        %v399 = vsel %vm397, %v381, 0
        %v402 = vsel %vm397, %v382, 0
        %404 = vmatprep.subr.mxu0 0.0
        %405 = vmatpush1.msra.mxu0 %v261
        %406 = vmatprep.subr.mxu0 0.0
        %407 = vmatpush1.msra.mxu0 0.0
        %408 = vmatprep.subr.mxu0 0.0
        %409 = vmatpush1.msra.mxu0 0.0
        %410 = vmatprep.subr.mxu0 0.0
        %411 = vmatpush1.msra.mxu0 0.0
        %412 = vmatprep.subr.mxu0 0.0
        %413 = vmatpush1.msra.mxu0 0.0
        %414 = vmatprep.subr.mxu0 0.0
        %415 = vmatpush1.msra.mxu0 0.0
        %416 = vmatprep.subr.mxu0 0.0
        %417 = vmatpush1.msra.mxu0 0.0
        %418 = vmatprep.subr.mxu0 0.0
        %419 = vmatpush1.msra.mxu0 0.0
        %420 = vmatprep.subr.mxu0 0.0
        %421 = vmatpush1.msra.mxu0 0.0
        %422 = vmatprep.subr.mxu0 0.0
        %423 = vmatpush1.msra.mxu0 0.0
        %424 = vmatprep.subr.mxu0 0.0
        %425 = vmatpush1.msra.mxu0 0.0
        %426 = vmatprep.subr.mxu0 0.0
        %427 = vmatpush1.msra.mxu0 0.0
        %428 = vmatprep.subr.mxu0 0.0
        %429 = vmatpush1.msra.mxu0 0.0
        %430 = vmatprep.subr.mxu0 0.0
        %431 = vmatpush1.msra.mxu0 0.0
        %432 = vmatprep.subr.mxu0 0.0
        %433 = vmatpush1.msra.mxu0 0.0
        %434 = vmatprep.subr.mxu0 0.0
        %435 = vmatpush1.msra.mxu0 0.0
        %436 = vmatprep.subr.mxu0 0.0
        %437 = vmatpush1.msra.mxu0 0.0
        %438 = vmatprep.subr.mxu0 0.0
        %439 = vmatpush1.msra.mxu0 0.0
        %440 = vmatprep.subr.mxu0 0.0
        %441 = vmatpush1.msra.mxu0 0.0
        %442 = vmatprep.subr.mxu0 0.0
        %443 = vmatpush1.msra.mxu0 0.0
        %444 = vmatprep.subr.mxu0 0.0
        %445 = vmatpush1.msra.mxu0 0.0
        %446 = vmatprep.subr.mxu0 0.0
        %447 = vmatpush1.msra.mxu0 0.0
        %448 = vmatprep.subr.mxu0 0.0
        %449 = vmatpush1.msra.mxu0 0.0
        %450 = vmatprep.subr.mxu0 0.0
        %451 = vmatpush1.msra.mxu0 0.0
        %452 = vmatprep.subr.mxu0 0.0
        %453 = vmatpush1.msra.mxu0 0.0
        %454 = vmatprep.subr.mxu0 0.0
        %455 = vmatpush1.msra.mxu0 0.0
        %456 = vmatprep.subr.mxu0 0.0
        %457 = vmatpush1.msra.mxu0 0.0
        %458 = vmatprep.subr.mxu0 0.0
        %459 = vmatpush1.msra.mxu0 0.0
        %460 = vmatprep.subr.mxu0 0.0
        %461 = vmatpush1.msra.mxu0 0.0
        %462 = vmatprep.subr.mxu0 0.0
        %463 = vmatpush1.msra.mxu0 0.0
        %464 = vmatprep.subr.mxu0 0.0
        %465 = vmatpush1.msra.mxu0 0.0
        %466 = vmatprep.subr.mxu0 0.0
        %467 = vmatpush1.msra.mxu0 0.0
        %468 = vmatprep.mubr.f32.mxu0 0.0
        %469 = vmatmul.mubr.f32.gmra.mrb[0].mxu0 %v399
        %v470 = vpop.f32.mrb[0].mxu0
        %v471 = vadd.f32 0.0, %v470
        %v472 = vpop.f32.mrb[0].mxu0
        %473 = vmatprep.mubr.f32.mxu0 0.0
        %474 = vmatmul.mubr.f32.gmra.mrb[0].mxu0 %v402
        %v475 = vpop.f32.mrb[0].mxu0
        %v476 = vadd.f32 0.0, %v475
        %v477 = vpop.f32.mrb[0].mxu0
        %478 = vdwg.mxu0
        %479 = vst.msk [vmem:[%s237] sm:$0xff] %vm264, %v471
        %480 = vst.msk [vmem:[%s237 + $0x8] sm:$0xff] %vm264, %v476
        %s481 = sand.u32 %s122, 1
        %s482 = scalar_lea.sflag [#allocation3], %s481
        %s483 = sand.u32 %s122, 1
        %s484 = smul.addr %s483, 16
        %s485 = scalar_lea.vmem [#allocation2], %s484
        %s486 = sand.u32 %s150, 1
        %s487 = scalar_lea.sflag [#allocation5], %s486
        %s488 = sand.u32 %s150, 1
        %s489 = smul.addr %s488, 8
        %s490 = scalar_lea.vmem [#allocation4], %s489
        // Predicated region
        $region33: #{drugwise_attention_layer.1} parent=31 // pred_check
          %p491 = pneg %p132
        $region34: #{drugwise_attention_layer.1} parent=31 // pred_check_branch
          %493 = sbr.rel (%p491) target = $region36
        $region35: #{drugwise_attention_layer.1} parent=31 // pred_region
          %s494 = smul.u32 2, %s26
          %s496 = ssub.s32 256, 256
          %497 = vsyncadd %s482, %s496
          %s498 = smul.addr %s27, 2
          %s499 = sadd.s32 %s494, %s498
          %s500 = smul.addr %s499, 128
          %s501 = scalar_lea.hbm %s3, %s500
          %s502 = sshll.u32 %s485, 4
          %s503 = int_to_ptr.vmem [resolvable:$true] %s502
          %508 = dma.vmem_to_hbm [thread:$0]  %s503, 256, %s501, %s482, 128, 128, 8
        $region36: #{drugwise_attention_layer.1} parent=31 // pred_fallthru
          _
        // Predicated region
        $region37: #{drugwise_attention_layer.1} parent=31 // pred_check
          %p509 = pneg %p160
        $region38: #{drugwise_attention_layer.1} parent=31 // pred_check_branch
          %511 = sbr.rel (%p509) target = $region40
        $region39: #{drugwise_attention_layer.1} parent=31 // pred_region
          %s513 = ssub.s32 128, 128
          %514 = vsyncadd %s487, %s513
          %s515 = sadd.s32 %s26, %s27
          %s516 = smul.addr %s515, 128
          %s517 = scalar_lea.hbm %s4, %s516
          %s519 = sshll.u32 %s490, 4
          %s520 = int_to_ptr.vmem [resolvable:$true] %s519
          %522 = dma.vmem_to_hbm [thread:$0]  %s520, 128, %s517, %s487
        $region40: #{drugwise_attention_layer.1} parent=31 // pred_fallthru
          _
      $region32: #{drugwise_attention_layer.1} parent=5 // pred_fallthru
        _
      %p523 = scmp.le.s32.totalorder 2, %s17
      // Predicated region
      $region41: #{drugwise_attention_layer.1} parent=5 // pred_check
        %p524 = pneg %p523
      $region42: #{drugwise_attention_layer.1} parent=5 // pred_check_branch
        %526 = sbr.rel (%p524) target = $region44
      $region43: #{drugwise_attention_layer.1} parent=5 // pred_region
        %s527 = ssub.s32 %s17, 2
        // Predicated region
        $region45: #{drugwise_attention_layer.1} parent=43 // pred_check
          %p528 = pneg %p138
        $region46: #{drugwise_attention_layer.1} parent=43 // pred_check_branch
          %530 = sbr.rel (%p528) target = $region48
        $region47: #{drugwise_attention_layer.1} parent=43 // pred_region
          %s531 = sand.u32 %s123, 1
          %s532 = scalar_lea.sflag [#allocation3], %s531
          %s533 = sand.u32 %s123, 1
          %s534 = smul.addr %s533, 16
          %s535 = scalar_lea.vmem [#allocation2], %s534
          %536 = dma.done %s532, 256
        $region48: #{drugwise_attention_layer.1} parent=43 // pred_fallthru
          _
        // Predicated region
        $region49: #{drugwise_attention_layer.1} parent=43 // pred_check
          %p537 = pneg %p166
        $region50: #{drugwise_attention_layer.1} parent=43 // pred_check_branch
          %539 = sbr.rel (%p537) target = $region52
        $region51: #{drugwise_attention_layer.1} parent=43 // pred_region
          %s540 = sand.u32 %s151, 1
          %s541 = scalar_lea.sflag [#allocation5], %s540
          %s542 = sand.u32 %s151, 1
          %s543 = smul.addr %s542, 8
          %s544 = scalar_lea.vmem [#allocation4], %s543
          %545 = dma.done %s541, 128
        $region52: #{drugwise_attention_layer.1} parent=43 // pred_fallthru
          _
      $region44: #{drugwise_attention_layer.1} parent=5 // pred_fallthru
        _
    $region6: #{drugwise_attention_layer.1} parent=1 // loop_footer
      %s21 = sadd.s32 1, %s17
    $region7: #{drugwise_attention_layer.1} parent=1 // loop_footer_branch
      %16 = sbr.rel target = $region3
    $region8: #{drugwise_attention_layer.1} parent=1 // loop_exit
      _
    %546 = vsyncpa [#allocation3], 1
    %s547 = scalar_lea.sflag [#allocation3], 1
    %548 = vsyncpa %s547, 1
    %549 = vsyncpa [#allocation5], 1
    %s550 = scalar_lea.sflag [#allocation5], 1
    %551 = vsyncpa %s550, 1

</llo_original>
